<compile_context>
chip_gen: v6e
topology: v6e:2x2x1
jax: 0.10.0
libtpu: 0.0.40
codegen_flags: <defaults>
</compile_context>

<pallas_src>
import functools

import jax
import jax.numpy as jnp
from jax.experimental import pallas as pl
from jax.experimental.pallas import tpu as pltpu

CLAMP_MIN = 6380.7001953125
CLAMP_MAX = 6380.13720703125


def conv_clamp_kernel(x_ref, w_ref, o_ref, *, H, WCo):
    # x_ref: (N*H, W*Cin)        bf16  all images stacked along sublanes
    # w_ref: (W*Cin, 3*W*Cout)   bf16  banded weights [M_kh0 | M_kh1 | M_kh2]
    # o_ref: (N*H, W*Cout)       f32   lane-dense output slab (W*Cout = 128)
    x = x_ref[...]
    nh = x.shape[0]

    # Single MXU push/drain: K = W*Cin, Nout = 3*W*Cout, f32 accumulation.
    q = jnp.dot(x, w_ref[...], preferred_element_type=jnp.float32)  # (NH, 3*WCo)

    # 128-lane-aligned partials for the three kh taps.
    q0 = q[:, :WCo]            # kh = 0 contribution, needs row r-1
    q1 = q[:, WCo:2 * WCo]     # kh = 1 contribution, row r
    q2 = q[:, 2 * WCo:]        # kh = 2 contribution, needs row r+1

    # H-direction padding=1 with cross-image masking:
    #   out[r] = q0[r-1] + q1[r] + q2[r+1],
    # where q0 is zeroed on each image's first row and q2 on its last row.
    row = jax.lax.broadcasted_iota(jnp.int32, (nh, WCo), 0)
    h_in_img = row % H
    acc = q1
    acc = acc + jnp.where(h_in_img == 0, 0.0,
                          pltpu.roll(q0, shift=1, axis=0))
    acc = acc + jnp.where(h_in_img == H - 1, 0.0,
                          pltpu.roll(q2, shift=nh - 1, axis=0))

    v2 = jnp.maximum(acc, CLAMP_MIN)   # torch.clamp(min=...)
    v3 = jnp.minimum(v2, CLAMP_MAX)    # torch.clamp(max=...)
    o_ref[...] = v3.astype(o_ref.dtype)


def build_band_weights(w_hwio, W):
    """Fold the 3x3 conv (with W-direction padding=1) into three banded
    matrices M_kh of shape (W*Cin, W*Cout) such that, for flattened rows
    xrow_h[w*Cin + ci] = x[h, w, ci]:
        out_row_h = sum_kh  xrow_{h+kh-1} @ M_kh   (out-of-range rows are zero).
    Returned fused as [M_0 | M_1 | M_2] of shape (W*Cin, 3*W*Cout).
    One-time weight packing (wrapper side, outside the kernel)."""
    KH, KW, Cin, Cout = w_hwio.shape
    eye_w = jnp.eye(W, dtype=w_hwio.dtype)
    mats = []
    for kh in range(KH):
        m = jnp.zeros((W * Cin, W * Cout), w_hwio.dtype)
        for kw in range(KW):
            # Block-diagonal with w[kh, kw] on the diagonal blocks ...
            d = jnp.kron(eye_w, w_hwio[kh, kw])            # (W*Cin, W*Cout)
            # ... shifted by (kw-1)*Cin rows; rows shifted out are dropped,
            # which implements the zero-padding in the W direction.
            shift = (kw - 1) * Cin
            if shift > 0:
                d = jnp.concatenate(
                    [jnp.zeros((shift, W * Cout), d.dtype), d[:-shift]], axis=0)
            elif shift < 0:
                d = jnp.concatenate(
                    [d[-shift:], jnp.zeros((-shift, W * Cout), d.dtype)], axis=0)
            m = m + d
        mats.append(m)
    return jnp.concatenate(mats, axis=1)                   # (W*Cin, 3*W*Cout)


def model_forward(x_nhwc, w_hwio):
    """x_nhwc: (N, H, W, Cin) float32; w_hwio: (3, 3, Cin, Cout) float32."""
    N, H, W, Cin = x_nhwc.shape
    Cout = w_hwio.shape[-1]

    # One-time weight packing; bf16 halves the weight DMA (exact output is
    # unaffected because the double clamp pins the result to CLAMP_MAX).
    w_band = build_band_weights(w_hwio, W).astype(jnp.bfloat16)

    # Free (contiguous) collapse: fold N into the sublane axis and pack W, Cin
    # into lanes.  bf16 cast here halves the input DMA.
    x_rows = x_nhwc.reshape(N * H, W * Cin).astype(jnp.bfloat16)

    kern = functools.partial(conv_clamp_kernel, H=H, WCo=W * Cout)
    out_rows = pl.pallas_call(
        kern,
        out_shape=jax.ShapeDtypeStruct((N * H, W * Cout), jnp.float32),
        in_specs=[
            pl.BlockSpec(memory_space=pltpu.MemorySpace.VMEM),
            pl.BlockSpec(memory_space=pltpu.MemorySpace.VMEM),
        ],
        out_specs=pl.BlockSpec(memory_space=pltpu.MemorySpace.VMEM),
    )(x_rows, w_band)

    # Free (contiguous) expand back to NHWC.
    return out_rows.reshape(N, H, W, Cout)


def make_weight(cin=3, cout=8):
    # Deterministic "eye-like" weight: identity mapping on the center tap,
    # scaled by -0.0001 (mirrors the torch.eye(...) * -0.0001 intent).
    w = jnp.zeros((3, 3, cin, cout), jnp.float32)
    eye = jnp.eye(cin, cout, dtype=jnp.float32) * (-0.0001)
    w = w.at[1, 1, :, :].set(eye)
    return w


if __name__ == "__main__":
    key = jax.random.PRNGKey(0)
    N, H, W, Cin, Cout = 2, 16, 16, 3, 8

    x = jax.random.normal(key, (N, H, W, Cin), dtype=jnp.float32)
    w = make_weight(Cin, Cout)

    out = model_forward(x, w)
    out = jax.block_until_ready(out)

    # Reference check in plain JAX (conv + double clamp).
    ref_conv = jax.lax.conv_general_dilated(
        x, w, window_strides=(1, 1), padding="SAME",
        dimension_numbers=("NHWC", "HWIO", "NHWC"),
    )
    ref = jnp.minimum(jnp.maximum(ref_conv, CLAMP_MIN), CLAMP_MAX)
    assert out.shape == (N, H, W, Cout)
    assert jnp.allclose(out, ref, atol=1e-5, rtol=1e-5)

    print("KERNEL_OK")
</pallas_src>

<mosaic_0001>
module attributes {stable_mosaic.version = 11 : i64} {
  func.func @conv_clamp_kernel(%arg0: memref<32x48xbf16, #tpu.memory_space<vmem>>, %arg1: memref<48x384xbf16, #tpu.memory_space<vmem>>, %arg2: memref<32x128xf32, #tpu.memory_space<vmem>>) attributes {dimension_semantics = [], scalar_prefetch = 0 : i64, scratch_operands = 0 : i64, tpu.core_type = #tpu.core_type<tc>} {
    %c0 = arith.constant 0 : index
    %c0_0 = arith.constant 0 : index
    %0 = vector.load %arg0[%c0, %c0_0] : memref<32x48xbf16, #tpu.memory_space<vmem>>, vector<32x48xbf16>
    %c0_1 = arith.constant 0 : index
    %c0_2 = arith.constant 0 : index
    %1 = vector.load %arg1[%c0_1, %c0_2] : memref<48x384xbf16, #tpu.memory_space<vmem>>, vector<48x384xbf16>
    %cst = arith.constant dense<0.000000e+00> : vector<32x384xf32>
    %2 = tpu.matmul %0, %1, %cst {dimension_numbers = #tpu.dot_dimension_numbers<[1], [0], [0], [1], [0, 0, 1, 1], [], []>} : vector<32x48xbf16>, vector<48x384xbf16>, vector<32x384xf32> -> vector<32x384xf32>
    %3 = vector.extract_strided_slice %2 {offsets = [0, 0], sizes = [32, 128], strides = [1, 1]} : vector<32x384xf32> to vector<32x128xf32>
    %4 = vector.extract_strided_slice %2 {offsets = [0, 128], sizes = [32, 128], strides = [1, 1]} : vector<32x384xf32> to vector<32x128xf32>
    %5 = vector.extract_strided_slice %2 {offsets = [0, 256], sizes = [32, 128], strides = [1, 1]} : vector<32x384xf32> to vector<32x128xf32>
    %6 = tpu.iota {dimensions = array<i32: 0>} : vector<32x128xi32>
    %c16_i32 = arith.constant 16 : i32
    %c0_i32 = arith.constant 0 : i32
    %7 = arith.cmpi eq, %c16_i32, %c0_i32 : i32
    %c1_i32 = arith.constant 1 : i32
    %8 = arith.select %7, %c1_i32, %c16_i32 : i32
    %9 = vector.broadcast %8 : i32 to vector<32x128xi32>
    %10 = arith.remsi %6, %9 : vector<32x128xi32>
    %c0_i32_3 = arith.constant 0 : i32
    %11 = vector.broadcast %c0_i32_3 : i32 to vector<32x128xi32>
    %12 = arith.cmpi ne, %10, %11 : vector<32x128xi32>
    %c0_i32_4 = arith.constant 0 : i32
    %13 = vector.broadcast %c0_i32_4 : i32 to vector<32x128xi32>
    %14 = arith.cmpi slt, %10, %13 : vector<32x128xi32>
    %c0_i32_5 = arith.constant 0 : i32
    %15 = arith.cmpi slt, %8, %c0_i32_5 : i32
    %16 = vector.broadcast %15 : i1 to vector<32x128xi1>
    %17 = vector.broadcast %16 : vector<32x128xi1> to vector<32x128xi1>
    %18 = arith.xori %14, %17 : vector<32x128xi1>
    %19 = arith.andi %18, %12 : vector<32x128xi1>
    %20 = vector.broadcast %8 : i32 to vector<32x128xi32>
    %21 = arith.addi %10, %20 : vector<32x128xi32>
    %22 = arith.select %19, %21, %10 : vector<32x128xi1>, vector<32x128xi32>
    %c0_i32_6 = arith.constant 0 : i32
    %23 = vector.broadcast %c0_i32_6 : i32 to vector<32x128xi32>
    %24 = arith.cmpi eq, %22, %23 : vector<32x128xi32>
    %c1_i32_7 = arith.constant 1 : i32
    %25 = tpu.dynamic_rotate %3 by %c1_i32_7 dim 0 : vector<32x128xf32>, i32 -> vector<32x128xf32>
    %cst_8 = arith.constant 0.000000e+00 : f32
    %26 = vector.broadcast %cst_8 : f32 to vector<32x128xf32>
    %27 = arith.select %24, %26, %25 : vector<32x128xi1>, vector<32x128xf32>
    %28 = arith.addf %4, %27 : vector<32x128xf32>
    %c15_i32 = arith.constant 15 : i32
    %29 = vector.broadcast %c15_i32 : i32 to vector<32x128xi32>
    %30 = arith.cmpi eq, %22, %29 : vector<32x128xi32>
    %c31_i32 = arith.constant 31 : i32
    %31 = tpu.dynamic_rotate %5 by %c31_i32 dim 0 : vector<32x128xf32>, i32 -> vector<32x128xf32>
    %cst_9 = arith.constant 0.000000e+00 : f32
    %32 = vector.broadcast %cst_9 : f32 to vector<32x128xf32>
    %33 = arith.select %30, %32, %31 : vector<32x128xi1>, vector<32x128xf32>
    %34 = arith.addf %28, %33 : vector<32x128xf32>
    %cst_10 = arith.constant 6.380700e+03 : f32
    %35 = vector.broadcast %cst_10 : f32 to vector<32x128xf32>
    %36 = arith.maximumf %34, %35 : vector<32x128xf32>
    %cst_11 = arith.constant 6380.1372 : f32
    %37 = vector.broadcast %cst_11 : f32 to vector<32x128xf32>
    %38 = arith.minimumf %36, %37 : vector<32x128xf32>
    %c0_12 = arith.constant 0 : index
    %c0_13 = arith.constant 0 : index
    %39 = vector.load %arg2[%c0_12, %c0_13] : memref<32x128xf32, #tpu.memory_space<vmem>>, vector<32x128xf32>
    tpu.vector_store %arg2[%c0_12, %c0_13], %38 {strides = array<i32>} : memref<32x128xf32, #tpu.memory_space<vmem>>, vector<32x128xf32>,
    return
  }
}

</mosaic_0001>

<llo_original>
// kernel: tpu_custom_call.1
$region0: #{tpu_custom_call.1}
  #allocation0 [shape = 'u32[]', space=smem, size = 0x4, offset = 0x4, fixed_abs, tag = 'smem constant byte address 0x4 - core index']
  #allocation1 [shape = 'u32[144,128]{1,0:T(1,128)}', space=vmem, size = 0x12000, scoped, tag = 'internal scratch']
  %s0 = inlined_call_operand.hbm [shape: bf16[32,48], index: 0, kind: input, shape index: {}]
  %s1 = inlined_call_operand.hbm [shape: bf16[48,384], index: 1, kind: input, shape index: {}]
  %s2 = inlined_call_operand.hbm [shape: f32[32,128], index: 2, kind: output, shape index: {}]
  %s3 = sld [smem:[#allocation0]]
  $region26: #{tpu_custom_call.1} parent=0
    _
  %s5 = ssub.s32 1, %s3
  %s6 = scalar_select 0, %s5, %s3
  $region1: #{tpu_custom_call.1} parent=0
    #allocation2 [shape = 'u8[8192]{0}', space=vmem, size = 0x2000, scoped, tag = 'input window, operand 0, single buffered']
    #allocation3 [shape = 's32[1]{0}', space=sflag, size = 0x4, scoped, tag = 'scoped memory for tpu_custom_call.1']
    #allocation4 [shape = 's32[1]{0}', space=sflag, size = 0x4, scoped, tag = 'scoped memory for tpu_custom_call.1']
    #allocation5 [shape = 'u8[36864]{0}', space=vmem, size = 0x9000, scoped, tag = 'input window, operand 1, single buffered']
    #allocation6 [shape = 's32[1]{0}', space=sflag, size = 0x4, scoped, tag = 'scoped memory for tpu_custom_call.1']
    #allocation7 [shape = 'u8[16384]{0}', space=vmem, size = 0x4000, scoped, tag = 'output window, operand 0, single buffered']
    %7 = vsyncpa [#allocation3], 0
    %8 = vsyncpa [#allocation6], 0
    %9 = vsyncpa [#allocation4], 0
    // Predicated region
    $region2: #{tpu_custom_call.1} parent=1 // pred_check
      _
    $region3: #{tpu_custom_call.1} parent=1 // pred_check_branch
      %11 = sbr.rel (0) target = $region5
    $region4: #{tpu_custom_call.1} parent=1 // pred_region
      %s13 = ssub.s32 256, 256
      %14 = vsyncadd [#allocation3], %s13
      %s15 = sshll.u32 [#allocation2], 4
      %s16 = int_to_ptr.vmem [resolvable:$true] %s15
      %21 = dma.hbm_to_vmem [thread:$0]  %s0, 256, %s16, [#allocation3], 64, 64, 4
    $region5: #{tpu_custom_call.1} parent=1 // pred_fallthru
      _
    // Predicated region
    $region6: #{tpu_custom_call.1} parent=1 // pred_check
      _
    $region7: #{tpu_custom_call.1} parent=1 // pred_check_branch
      %23 = sbr.rel (0) target = $region9
    $region8: #{tpu_custom_call.1} parent=1 // pred_region
      %s25 = ssub.s32 1152, 1152
      %26 = vsyncadd [#allocation6], %s25
      %s27 = sshll.u32 [#allocation5], 4
      %s28 = int_to_ptr.vmem [resolvable:$true] %s27
      %33 = dma.hbm_to_vmem [thread:$0]  %s1, 1152, %s28, [#allocation6], 192, 192, 12
    $region9: #{tpu_custom_call.1} parent=1 // pred_fallthru
      _
    // Predicated region
    $region10: #{tpu_custom_call.1} parent=1 // pred_check
      _
    $region11: #{tpu_custom_call.1} parent=1 // pred_check_branch
      %35 = sbr.rel (0) target = $region13
    $region12: #{tpu_custom_call.1} parent=1 // pred_region
      %36 = dma.done [#allocation3], 256
    $region13: #{tpu_custom_call.1} parent=1 // pred_fallthru
      _
    // Predicated region
    $region14: #{tpu_custom_call.1} parent=1 // pred_check
      _
    $region15: #{tpu_custom_call.1} parent=1 // pred_check_branch
      %38 = sbr.rel (0) target = $region17
    $region16: #{tpu_custom_call.1} parent=1 // pred_region
      %39 = dma.done [#allocation6], 1152
    $region17: #{tpu_custom_call.1} parent=1 // pred_fallthru
      _
    %v41 = vld [vmem:[#allocation2] sm:$0xf]
    %v42 = vld [vmem:[#allocation2 + $0x4] sm:$0xf]
    %v43 = vld [vmem:[#allocation2 + $0x8] sm:$0xf]
    %v44 = vld [vmem:[#allocation2 + $0xc] sm:$0xf]
    %v45 = vld [vmem:[#allocation5] sm:$0xff]
    %v46 = vld [vmem:[#allocation5 + $0x8] sm:$0xf]
    %v47 = vld [vmem:[#allocation5 + $0xc] sm:$0xff]
    %v48 = vld [vmem:[#allocation5 + $0x14] sm:$0xf]
    %v49 = vld [vmem:[#allocation5 + $0x18] sm:$0xff]
    %v50 = vld [vmem:[#allocation5 + $0x20] sm:$0xf]
    %v51 = vld [vmem:[#allocation5 + $0x24] sm:$0xff]
    %v52 = vld [vmem:[#allocation5 + $0x2c] sm:$0xf]
    %v53 = vld [vmem:[#allocation5 + $0x30] sm:$0xff]
    %v54 = vld [vmem:[#allocation5 + $0x38] sm:$0xf]
    %v55 = vld [vmem:[#allocation5 + $0x3c] sm:$0xff]
    %v56 = vld [vmem:[#allocation5 + $0x44] sm:$0xf]
    %v61 = vunpack.c.l.b16 %v41
    %v62 = vunpack.c.l.b16 %v42
    %v63 = vunpack.c.l.b16 %v43
    %v64 = vunpack.c.l.b16 %v44
    %v65 = vpack.c.b16 %v62, %v61
    %v66 = vpack.c.b16 %v64, %v63
    %v79 = vunpack.c.l.b16 %v45
    %v80 = vunpack.c.h.b16 %v45
    %v81 = vunpack.c.l.b16 %v46
    %v82 = vunpack.c.l.b16 %v47
    %v83 = vunpack.c.h.b16 %v47
    %v84 = vunpack.c.l.b16 %v48
    %v85 = vunpack.c.l.b16 %v49
    %v86 = vunpack.c.h.b16 %v49
    %v87 = vunpack.c.l.b16 %v50
    %v88 = vunpack.c.l.b16 %v51
    %v89 = vunpack.c.h.b16 %v51
    %v90 = vunpack.c.l.b16 %v52
    %v91 = vunpack.c.l.b16 %v53
    %v92 = vunpack.c.h.b16 %v53
    %v93 = vunpack.c.l.b16 %v54
    %v94 = vunpack.c.l.b16 %v55
    %v95 = vunpack.c.h.b16 %v55
    %v96 = vunpack.c.l.b16 %v56
    %v97 = vpack.c.b16 %v82, %v79
    %v98 = vpack.c.b16 %v83, %v80
    %v99 = vpack.c.b16 %v84, %v81
    %v100 = vpack.c.b16 %v88, %v85
    %v101 = vpack.c.b16 %v89, %v86
    %v102 = vpack.c.b16 %v90, %v87
    %v103 = vpack.c.b16 %v94, %v91
    %v104 = vpack.c.b16 %v95, %v92
    %v105 = vpack.c.b16 %v96, %v93
    %vm115 = vcmask 392192
    %v117 = vsel %vm115, %v65, 0
    %v120 = vsel %vm115, %v66, 0
    %122 = vmatprep.subr.bf16.mxu0 0
    %123 = vmatpush1.bf16.msra.mxu0 0
    %124 = vmatprep.subr.bf16.mxu0 0
    %125 = vmatpush1.bf16.msra.mxu0 0
    %126 = vmatprep.subr.bf16.mxu0 0
    %127 = vmatpush1.bf16.msra.mxu0 0
    %128 = vmatprep.subr.bf16.mxu0 0
    %129 = vmatpush1.bf16.msra.mxu0 0
    %130 = vmatprep.subr.bf16.mxu0 0
    %131 = vmatpush1.bf16.msra.mxu0 0
    %132 = vmatprep.subr.bf16.mxu0 %v104
    %133 = vmatpush1.bf16.msra.mxu0 %v103
    %134 = vmatprep.subr.bf16.mxu0 %v101
    %135 = vmatpush1.bf16.msra.mxu0 %v100
    %136 = vmatprep.subr.bf16.mxu0 %v98
    %137 = vmatpush1.bf16.msra.mxu0 %v97
    %138 = vmatprep.subr.bf16.mxu0 0
    %139 = vmatpush2.bf16.msra.mxu0 0
    %140 = vmatprep.subr.bf16.mxu0 0
    %141 = vmatpush2.bf16.msra.mxu0 0
    %142 = vmatprep.subr.bf16.mxu0 0
    %143 = vmatpush2.bf16.msra.mxu0 0
    %144 = vmatprep.subr.bf16.mxu0 0
    %145 = vmatpush2.bf16.msra.mxu0 0
    %146 = vmatprep.subr.bf16.mxu0 0
    %147 = vmatpush2.bf16.msra.mxu0 0
    %148 = vmatprep.subr.bf16.mxu0 0
    %149 = vmatpush2.bf16.msra.mxu0 0
    %150 = vmatprep.subr.bf16.mxu0 0
    %151 = vmatpush2.bf16.msra.mxu0 0
    %152 = vmatprep.subr.bf16.mxu0 0
    %153 = vmatpush2.bf16.msra.mxu0 0
    %154 = vmatprep.mubr.bf16.mxu0 0
    %155 = vmatmul.mubr.bf16.gmra.mxu0 %v117
    %v156 = vpop.f32.mrf.mxu0
    %v157 = vadd.f32 0.0, %v156
    %v158 = vpop.f32.mrf.mxu0
    %v159 = vadd.f32 0.0, %v158
    %v160 = vpop.f32.mrf.mxu0
    %v161 = vadd.f32 0.0, %v160
    %v162 = vpop.f32.mrf.mxu0
    %v163 = vadd.f32 0.0, %v162
    %164 = vmatprep.mubr.bf16.mxu0 0
    %165 = vmatmul.mubr.bf16.gmra.mxu0 %v120
    %v166 = vpop.f32.mrf.mxu0
    %v167 = vadd.f32 0.0, %v166
    %v168 = vpop.f32.mrf.mxu0
    %v169 = vadd.f32 0.0, %v168
    %v170 = vpop.f32.mrf.mxu0
    %v171 = vadd.f32 0.0, %v170
    %v172 = vpop.f32.mrf.mxu0
    %v173 = vadd.f32 0.0, %v172
    %174 = vdwg.mxu0
    %175 = vmatprep.subr.bf16.mxu0 0
    %176 = vmatpush1.bf16.msra.mxu0 0
    %177 = vmatprep.subr.bf16.mxu0 0
    %178 = vmatpush1.bf16.msra.mxu0 0
    %179 = vmatprep.subr.bf16.mxu0 0
    %180 = vmatpush1.bf16.msra.mxu0 0
    %181 = vmatprep.subr.bf16.mxu0 0
    %182 = vmatpush1.bf16.msra.mxu0 0
    %183 = vmatprep.subr.bf16.mxu0 0
    %184 = vmatpush1.bf16.msra.mxu0 0
    %185 = vmatprep.subr.bf16.mxu0 0
    %186 = vmatpush1.bf16.msra.mxu0 %v105
    %187 = vmatprep.subr.bf16.mxu0 0
    %188 = vmatpush1.bf16.msra.mxu0 %v102
    %189 = vmatprep.subr.bf16.mxu0 0
    %190 = vmatpush1.bf16.msra.mxu0 %v99
    %191 = vmatprep.subr.bf16.mxu0 0
    %192 = vmatpush2.bf16.msra.mxu0 0
    %193 = vmatprep.subr.bf16.mxu0 0
    %194 = vmatpush2.bf16.msra.mxu0 0
    %195 = vmatprep.subr.bf16.mxu0 0
    %196 = vmatpush2.bf16.msra.mxu0 0
    %197 = vmatprep.subr.bf16.mxu0 0
    %198 = vmatpush2.bf16.msra.mxu0 0
    %199 = vmatprep.subr.bf16.mxu0 0
    %200 = vmatpush2.bf16.msra.mxu0 0
    %201 = vmatprep.subr.bf16.mxu0 0
    %202 = vmatpush2.bf16.msra.mxu0 0
    %203 = vmatprep.subr.bf16.mxu0 0
    %204 = vmatpush2.bf16.msra.mxu0 0
    %205 = vmatprep.subr.bf16.mxu0 0
    %206 = vmatpush2.bf16.msra.mxu0 0
    %207 = vmatprep.mubr.bf16.mxu0 0
    %208 = vmatmul.mubr.bf16.gmra.mxu0 %v117
    %v209 = vpop.f32.mrf.mxu0
    %v210 = vadd.f32 0.0, %v209
    %v211 = vpop.f32.mrf.mxu0
    %v212 = vpop.f32.mrf.mxu0
    %v213 = vadd.f32 0.0, %v212
    %v214 = vpop.f32.mrf.mxu0
    %215 = vmatprep.mubr.bf16.mxu0 0
    %216 = vmatmul.mubr.bf16.gmra.mxu0 %v120
    %v217 = vpop.f32.mrf.mxu0
    %v218 = vadd.f32 0.0, %v217
    %v219 = vpop.f32.mrf.mxu0
    %v220 = vpop.f32.mrf.mxu0
    %v221 = vadd.f32 0.0, %v220
    %v222 = vpop.f32.mrf.mxu0
    %223 = vdwg.mxu0
    %v224 = vlaneseq
    %v225 = vshrl.u32 %v224, 7
    %v226 = vadd.s32 %v225, 8
    %v227 = vadd.s32 %v225, 16
    %v228 = vadd.s32 %v225, 24
    %vm229 = vcmp.lt.s32.totalorder %v225, 0
    %v230 = vsub.s32 0, %v225
    %v231 = vsel %vm229, %v230, %v225
    %v232 = vshrl.u32 %v231, 4
    %v233 = vand.u32 %v231, 15
    %v234 = vsub.s32 0, %v233
    %v235 = vsel %vm229, %v234, %v233
    %vm236 = vcmp.lt.s32.totalorder %v226, 0
    %v237 = vsub.s32 0, %v226
    %v238 = vsel %vm236, %v237, %v226
    %v239 = vshrl.u32 %v238, 4
    %v240 = vand.u32 %v238, 15
    %v241 = vsub.s32 0, %v240
    %v242 = vsel %vm236, %v241, %v240
    %vm243 = vcmp.lt.s32.totalorder %v227, 0
    %v244 = vsub.s32 0, %v227
    %v245 = vsel %vm243, %v244, %v227
    %v246 = vshrl.u32 %v245, 4
    %v247 = vand.u32 %v245, 15
    %v248 = vsub.s32 0, %v247
    %v249 = vsel %vm243, %v248, %v247
    %vm250 = vcmp.lt.s32.totalorder %v228, 0
    %v251 = vsub.s32 0, %v228
    %v252 = vsel %vm250, %v251, %v228
    %v253 = vshrl.u32 %v252, 4
    %v254 = vand.u32 %v252, 15
    %v255 = vsub.s32 0, %v254
    %v256 = vsel %vm250, %v255, %v254
    %vm257 = vcmp.ne.s32.totalorder %v235, 0
    %vm258 = vcmp.ne.s32.totalorder %v242, 0
    %vm259 = vcmp.ne.s32.totalorder %v249, 0
    %vm260 = vcmp.ne.s32.totalorder %v256, 0
    %vm261 = vcmp.lt.s32.totalorder %v235, 0
    %vm262 = vcmp.lt.s32.totalorder %v242, 0
    %vm263 = vcmp.lt.s32.totalorder %v249, 0
    %vm264 = vcmp.lt.s32.totalorder %v256, 0
    %vm265 = vmand %vm261, %vm257
    %vm266 = vmand %vm262, %vm258
    %vm267 = vmand %vm263, %vm259
    %vm268 = vmand %vm264, %vm260
    %v269 = vadd.s32 %v235, 16
    %v270 = vadd.s32 %v242, 16
    %v271 = vadd.s32 %v249, 16
    %v272 = vadd.s32 %v256, 16
    %v273 = vsel %vm265, %v269, %v235
    %v274 = vsel %vm266, %v270, %v242
    %v275 = vsel %vm267, %v271, %v249
    %v276 = vsel %vm268, %v272, %v256
    %vm277 = vcmp.eq.s32.totalorder %v273, 0
    %vm278 = vcmp.eq.s32.totalorder %v274, 0
    %vm279 = vcmp.eq.s32.totalorder %v275, 0
    %vm280 = vcmp.eq.s32.totalorder %v276, 0
    %v281 = vrot.slane %v157, 7
    %v282 = vrot.slane %v161, 7
    %v283 = vrot.slane %v167, 7
    %v284 = vrot.slane %v171, 7
    %vm285 = vcmp.lt.s32.totalorder %v225, 1
    %v286 = vsel %vm285, %v283, %v284
    %v287 = vsel %vm285, %v282, %v283
    %v288 = vsel %vm285, %v281, %v282
    %v289 = vsel %vm285, %v284, %v281
    %v290 = vsel %vm277, 0.0, %v289
    %v291 = vsel %vm278, 0.0, %v288
    %v292 = vsel %vm279, 0.0, %v287
    %v293 = vsel %vm280, 0.0, %v286
    %v294 = vadd.f32 %v159, %v290
    %v295 = vadd.f32 %v163, %v291
    %v296 = vadd.f32 %v169, %v292
    %v297 = vadd.f32 %v173, %v293
    %vm298 = vcmp.eq.s32.totalorder %v273, 15
    %vm299 = vcmp.eq.s32.totalorder %v274, 15
    %vm300 = vcmp.eq.s32.totalorder %v275, 15
    %vm301 = vcmp.eq.s32.totalorder %v276, 15
    %v302 = vrot.slane %v210, 1
    %v303 = vrot.slane %v213, 1
    %v304 = vrot.slane %v218, 1
    %v305 = vrot.slane %v221, 1
    %vm306 = vcmp.lt.s32.totalorder %v225, 7
    %v307 = vsel %vm306, %v304, %v305
    %v308 = vsel %vm306, %v303, %v304
    %v309 = vsel %vm306, %v302, %v303
    %v310 = vsel %vm306, %v305, %v302
    %v311 = vsel %vm298, 0.0, %v309
    %v312 = vsel %vm299, 0.0, %v308
    %v313 = vsel %vm300, 0.0, %v307
    %v314 = vsel %vm301, 0.0, %v310
    %v315 = vadd.f32 %v294, %v311
    %v316 = vadd.f32 %v295, %v312
    %v317 = vadd.f32 %v296, %v313
    %v318 = vadd.f32 %v297, %v314
    %v319 = vmax.f32 %v315, 6380.7
    %v320 = vmax.f32 %v316, 6380.7
    %v321 = vmax.f32 %v317, 6380.7
    %v322 = vmax.f32 %v318, 6380.7
    %v323 = vmin.f32 %v319, 6380.137
    %v324 = vmin.f32 %v320, 6380.137
    %v325 = vmin.f32 %v321, 6380.137
    %v326 = vmin.f32 %v322, 6380.137
    %327 = vst [vmem:[#allocation7] sm:$0xff] %v323
    %328 = vst [vmem:[#allocation7 + $0x8] sm:$0xff] %v324
    %329 = vst [vmem:[#allocation7 + $0x10] sm:$0xff] %v325
    %330 = vst [vmem:[#allocation7 + $0x18] sm:$0xff] %v326
    // Predicated region
    $region18: #{tpu_custom_call.1} parent=1 // pred_check
      _
    $region19: #{tpu_custom_call.1} parent=1 // pred_check_branch
      %332 = sbr.rel (0) target = $region21
    $region20: #{tpu_custom_call.1} parent=1 // pred_region
      %s334 = ssub.s32 512, 512
      %335 = vsyncadd [#allocation4], %s334
      %s336 = sshll.u32 [#allocation7], 4
      %s337 = int_to_ptr.vmem [resolvable:$true] %s336
      %342 = dma.vmem_to_hbm [thread:$0]  %s337, 512, %s2, [#allocation4], 128, 128, 8
    $region21: #{tpu_custom_call.1} parent=1 // pred_fallthru
      _
    // Predicated region
    $region22: #{tpu_custom_call.1} parent=1 // pred_check
      _
    $region23: #{tpu_custom_call.1} parent=1 // pred_check_branch
      %344 = sbr.rel (0) target = $region25
    $region24: #{tpu_custom_call.1} parent=1 // pred_region
      %345 = dma.done [#allocation4], 512
    $region25: #{tpu_custom_call.1} parent=1 // pred_fallthru
      _
    %346 = vsyncpa [#allocation3], 1
    %347 = vsyncpa [#allocation6], 1
    %348 = vsyncpa [#allocation4], 1

</llo_original>
